<compile_context>
chip_gen: v6e
topology: v6e:2x2x1
jax: 0.10.0
libtpu: 0.0.40
codegen_flags: <defaults>
</compile_context>

<pallas_src>
import functools
import math

import jax
import jax.numpy as jnp
from jax.experimental import pallas as pl
from jax.experimental.pallas import tpu as pltpu


# --------------------------------------------------------------------------
# Generation-aware budgets and tile pickers
# --------------------------------------------------------------------------
@functools.lru_cache(maxsize=None)
def _vmem_limit_bytes():
    """Scoped-VMEM budget: ~half of physical VMEM, capped at 64 MiB.
    v5e/v6e (128 MiB physical) -> 64 MiB; v7x (64 MiB physical) -> 32 MiB."""
    try:
        cap = int(pltpu.get_tpu_info().vmem_capacity_bytes)
    except Exception:
        cap = 128 * 1024 * 1024
    return max(16 * 1024 * 1024, min(cap // 2, 64 * 1024 * 1024))


@functools.lru_cache(maxsize=None)
def _tile_caps():
    if _vmem_limit_bytes() >= 48 * 1024 * 1024:      # v5e / v6e (128 MiB VMEM)
        return {"tm": 512, "tn": 2048, "tk": 2048}
    return {"tm": 256, "tn": 1024, "tk": 2048}       # v7x (64 MiB VMEM / TC)


def _compiler_params(dims):
    return pltpu.CompilerParams(
        dimension_semantics=dims,
        vmem_limit_bytes=_vmem_limit_bytes(),
    )


def _pick_tile_m(m, cap):
    """Row (sublane) tile: a multiple of 8 that divides m and is <= cap,
    preferring >= 2 grid steps (pipelining / megacore); otherwise the full
    dimension (always legal). Never returns 1 for awkward M."""
    cap = min(cap, m)
    if m % 8 != 0 or m <= 8:
        return m
    half = (m // 2) - ((m // 2) % 8)
    cap = min(cap, max(8, half))
    t = cap - (cap % 8)
    while t >= 8:
        if m % t == 0:
            return t
        t -= 8
    return m


def _pick_tile_n(n, cap):
    """Lane tile: a multiple of 128 that divides n and is <= cap; else full."""
    cap = min(cap, n)
    if n % 128 != 0 or n <= 128:
        return n
    t = cap - (cap % 128)
    while t >= 128:
        if n % t == 0:
            return t
        t -= 128
    return n


def _erf(x):
    # Abramowitz & Stegun 7.1.26 rational approximation (|abs err| < 1.5e-7),
    # built from exp / mul / add / select; divide pushed to the EUP slot.
    a1, a2, a3, a4, a5 = (0.254829592, -0.284496736, 1.421413741,
                          -1.453152027, 1.061405429)
    p = 0.3275911
    ax = jnp.abs(x)
    t = pl.reciprocal(1.0 + p * ax, approx=True)
    poly = ((((a5 * t + a4) * t + a3) * t + a2) * t + a1) * t
    y = 1.0 - poly * jnp.exp(-ax * ax)
    return jnp.where(x < 0.0, -y, y)


# --------------------------------------------------------------------------
# Kernels
# --------------------------------------------------------------------------
def _dense_kernel(x_ref, w_ref, b_ref, o_ref):
    # out = x @ W + b   (W pre-transposed to [in,out], bf16; f32 accumulation)
    h = jnp.dot(x_ref[...].astype(jnp.bfloat16), w_ref[...],
                preferred_element_type=jnp.float32)
    o_ref[...] = (h + b_ref[...]).astype(o_ref.dtype)


def _dense_gelu_kernel(x_ref, w_ref, b_ref, o_ref):
    # out = gelu(x @ W + b)  — exact-erf gelu (erf via A&S rational approx)
    h = jnp.dot(x_ref[...].astype(jnp.bfloat16), w_ref[...],
                preferred_element_type=jnp.float32)
    h = h + b_ref[...]
    g = h * 0.5 * (1.0 + _erf(h * (1.0 / math.sqrt(2.0))))
    o_ref[...] = g.astype(o_ref.dtype)


def _dense_residual_ln_kernel(x_ref, w_ref, p_ref, res_ref, o_ref, acc_ref, *, eps):
    # out = LayerNorm(dropout(x @ W + b) + residual); dropout == identity (eval).
    # K-tiled: f32 accumulator in VMEM, LN epilogue on the last K step.
    kk = pl.program_id(1)

    @pl.when(kk == 0)
    def _():
        acc_ref[...] = jnp.zeros_like(acc_ref)

    acc_ref[...] += jnp.dot(x_ref[...].astype(jnp.bfloat16), w_ref[...],
                            preferred_element_type=jnp.float32)

    @pl.when(kk == pl.num_programs(1) - 1)
    def _():
        params = p_ref[...]                    # (3, H): bias / gamma / beta
        bias = params[0:1, :]
        gamma = params[1:2, :]
        beta = params[2:3, :]
        # fused bias + residual add
        y = acc_ref[...] + (res_ref[...].astype(jnp.float32) + bias)
        # TF-style LayerNorm (biased variance, eps inside the sqrt)
        u = jnp.mean(y, axis=-1, keepdims=True)
        d = y - u
        s = jnp.mean(d * d, axis=-1, keepdims=True)
        inv = jax.lax.rsqrt(s + eps)           # (TM,1) rsqrt -> EUP, broadcast mul
        o_ref[...] = (d * inv * gamma + beta).astype(o_ref.dtype)


def _attention_kernel(qkv_ref, mask_ref, o_ref, *, num_heads, head_dim, scale):
    # One batch element: per-head softmax((q k^T)*scale + mask/temp) @ v.
    # Q/K/V are read as head-column slices of the fused [S, 3H] QKV tile, so no
    # XLA transposes / head reshapes surround this kernel; the merged context
    # is written as one lane-dense (S, H) store.
    qkv = qkv_ref[0]                           # (S, 3H) bf16
    mask = mask_ref[0]                         # (1, S)  f32, pre-scaled by 1/temp
    hsz = num_heads * head_dim
    parts = []
    for hidx in range(num_heads):              # static unroll over heads
        c0 = hidx * head_dim
        q = qkv[:, c0:c0 + head_dim]
        k = qkv[:, hsz + c0:hsz + c0 + head_dim]
        v = qkv[:, 2 * hsz + c0:2 * hsz + c0 + head_dim]
        s = jax.lax.dot_general(q, k, (((1,), (1,)), ((), ())),
                                preferred_element_type=jnp.float32)   # (S, S)
        s = s * scale + mask                   # scale = 1/(sqrt(hd)*temp)
        m = jnp.max(s, axis=-1, keepdims=True)
        p = jnp.exp(s - m)                     # unnormalized probs
        l = jnp.sum(p, axis=-1, keepdims=True)
        # attention-prob dropout: identity in eval mode
        ctx = jnp.dot(p.astype(jnp.bfloat16), v, preferred_element_type=jnp.float32)
        ctx = ctx * pl.reciprocal(l, approx=True)   # normalize after P@V (EUP)
        parts.append(ctx.astype(o_ref.dtype))
    o_ref[0] = jnp.concatenate(parts, axis=-1)       # single lane-dense store


# --------------------------------------------------------------------------
# Wrappers
# --------------------------------------------------------------------------
def dense(x, w_t, b, *, out_dtype=None):
    """out = x @ w_t + b, row-tiled, resident bf16 weight."""
    out_dtype = out_dtype or x.dtype
    m, k = x.shape
    n = w_t.shape[1]
    tm = _pick_tile_m(m, _tile_caps()["tm"])
    return pl.pallas_call(
        _dense_kernel,
        out_shape=jax.ShapeDtypeStruct((m, n), out_dtype),
        grid_spec=pltpu.PrefetchScalarGridSpec(
            num_scalar_prefetch=0,
            grid=(m // tm,),
            in_specs=[
                pl.BlockSpec((tm, k), lambda i: (i, 0)),   # activation rows
                pl.BlockSpec((k, n), lambda i: (0, 0)),    # bf16 weight, resident
                pl.BlockSpec((1, n), lambda i: (0, 0)),    # bias
            ],
            out_specs=pl.BlockSpec((tm, n), lambda i: (i, 0)),
        ),
        compiler_params=_compiler_params(("parallel",)),
    )(x, w_t, b)


def dense_gelu(x, w_t, b, *, out_dtype=jnp.bfloat16):
    """out = gelu(x @ w_t + b), 2-D tiled over (N, M): weight column slab stays
    resident across the inner M axis, output stores are large and lane-dense."""
    m, k = x.shape
    n = w_t.shape[1]
    caps = _tile_caps()
    tm = _pick_tile_m(m, caps["tm"])
    tn = _pick_tile_n(n, caps["tn"])
    return pl.pallas_call(
        _dense_gelu_kernel,
        out_shape=jax.ShapeDtypeStruct((m, n), out_dtype),
        grid_spec=pltpu.PrefetchScalarGridSpec(
            num_scalar_prefetch=0,
            grid=(n // tn, m // tm),                       # N outer, M inner
            in_specs=[
                pl.BlockSpec((tm, k), lambda j, i: (i, 0)),   # x rows (bf16)
                pl.BlockSpec((k, tn), lambda j, i: (0, j)),   # weight column slab
                pl.BlockSpec((1, tn), lambda j, i: (0, j)),   # bias slice
            ],
            out_specs=pl.BlockSpec((tm, tn), lambda j, i: (i, j)),
        ),
        compiler_params=_compiler_params(("parallel", "parallel")),
    )(x, w_t, b)


def dense_residual_layernorm(x, residual, w_t, packed, *, eps=1e-12, out_dtype=None):
    """out = LayerNorm(x @ w_t + packed[0] + residual) * packed[1] + packed[2].
    K-tiled with an f32 VMEM accumulator (single K step for moderate K)."""
    out_dtype = out_dtype or residual.dtype
    m, k = x.shape
    h = w_t.shape[1]
    caps = _tile_caps()
    tm = _pick_tile_m(m, caps["tm"])
    tk = _pick_tile_n(k, caps["tk"])
    kernel = functools.partial(_dense_residual_ln_kernel, eps=eps)
    return pl.pallas_call(
        kernel,
        out_shape=jax.ShapeDtypeStruct((m, h), out_dtype),
        grid_spec=pltpu.PrefetchScalarGridSpec(
            num_scalar_prefetch=0,
            grid=(m // tm, k // tk),
            in_specs=[
                pl.BlockSpec((tm, tk), lambda i, kk: (i, kk)),  # x rows / K slice
                pl.BlockSpec((tk, h), lambda i, kk: (kk, 0)),   # weight K slab
                pl.BlockSpec((3, h), lambda i, kk: (0, 0)),     # bias/gamma/beta
                pl.BlockSpec((tm, h), lambda i, kk: (i, 0)),    # residual rows
            ],
            out_specs=pl.BlockSpec((tm, h), lambda i, kk: (i, 0)),
            scratch_shapes=[pltpu.VMEM((tm, h), jnp.float32)],
        ),
        compiler_params=_compiler_params(("parallel", "arbitrary")),
    )(x, w_t, packed, residual)


def self_attention(x, attn_mask, params, *, num_heads, temp=1.0):
    """BertSelfAttention forward. x: [B,S,H]; attn_mask: additive, [B,1,1,S].
    Returns the merged-head context as a flat [B*S, H] bf16 array."""
    b, s_len, h = x.shape
    hd = h // num_heads
    m = b * s_len

    # fused QKV projection (one [H, 3H] bf16 GEMM), output stays bf16
    qkv = dense(x.reshape(m, h), params["qkv_w"], params["qkv_b"],
                out_dtype=jnp.bfloat16)                      # [M, 3H]
    qkv = qkv.reshape(b, s_len, 3 * h)                       # free reshape

    mask = attn_mask.reshape(b, 1, s_len).astype(jnp.float32)
    if temp != 1.0:
        mask = mask * (1.0 / temp)                           # pre-scale mask once

    kernel = functools.partial(_attention_kernel, num_heads=num_heads,
                               head_dim=hd, scale=1.0 / (math.sqrt(hd) * temp))
    ctx = pl.pallas_call(
        kernel,
        out_shape=jax.ShapeDtypeStruct((b, s_len, h), jnp.bfloat16),
        grid_spec=pltpu.PrefetchScalarGridSpec(
            num_scalar_prefetch=0,
            grid=(b,),
            in_specs=[
                pl.BlockSpec((1, s_len, 3 * h), lambda i: (i, 0, 0)),
                pl.BlockSpec((1, 1, s_len), lambda i: (i, 0, 0)),
            ],
            out_specs=pl.BlockSpec((1, s_len, h), lambda i: (i, 0, 0)),
        ),
        compiler_params=_compiler_params(("parallel",)),
    )(qkv, mask)

    return ctx.reshape(m, h)                                 # free reshape


def bert_layer(hidden_states, attention_mask, params, *,
               num_heads, temp=1.0, eps=1e-12):
    """Full BertLayer forward (eval mode)."""
    b, s_len, h = hidden_states.shape
    m = b * s_len
    hidden2d = hidden_states.reshape(m, h)

    ctx = self_attention(hidden_states, attention_mask, params,
                         num_heads=num_heads, temp=temp)              # bf16 [M,H]
    # BertSelfOutput: dense + (dropout) + residual + LayerNorm (fused)
    attn_out = dense_residual_layernorm(
        ctx, hidden2d, params["attn_out_w"], params["attn_out_p"],
        eps=eps, out_dtype=jnp.bfloat16)                              # bf16 [M,H]
    # BertIntermediate: dense + gelu (fused, 2-D tiled wide GEMM)
    inter = dense_gelu(attn_out, params["inter_w"], params["inter_b"],
                       out_dtype=jnp.bfloat16)                        # bf16 [M,4H]
    # BertOutput: dense + (dropout) + residual + LayerNorm (fused)
    out = dense_residual_layernorm(
        inter, attn_out, params["out_w"], params["out_p"],
        eps=eps, out_dtype=hidden_states.dtype)                       # f32 [M,H]
    return out.reshape(b, s_len, h)


def prepare_params(raw, compute_dtype=jnp.bfloat16):
    """One-time parameter packing (NOT in the per-call path):
       - transpose PyTorch [out,in] weights to [in,out] and cast to bf16,
       - concatenate Q/K/V into one [H,3H] weight,
       - pack (bias, LN gamma, LN beta) into a single (3,H) f32 slab."""
    f32 = jnp.float32
    p = {}
    p["qkv_w"] = jnp.concatenate(
        [raw["wq"].T, raw["wk"].T, raw["wv"].T], axis=1).astype(compute_dtype)
    p["qkv_b"] = jnp.concatenate(
        [raw["bq"], raw["bk"], raw["bv"]]).reshape(1, -1).astype(f32)
    p["attn_out_w"] = raw["wo"].T.astype(compute_dtype)
    p["attn_out_p"] = jnp.stack([raw["bo"], raw["g1"], raw["be1"]]).astype(f32)
    p["inter_w"] = raw["wi"].T.astype(compute_dtype)
    p["inter_b"] = raw["bi"].reshape(1, -1).astype(f32)
    p["out_w"] = raw["w2"].T.astype(compute_dtype)
    p["out_p"] = jnp.stack([raw["b2"], raw["g2"], raw["be2"]]).astype(f32)
    return p


# --------------------------------------------------------------------------
# Pure-JAX f32 reference (mirrors the PyTorch module exactly)
# --------------------------------------------------------------------------
def bert_layer_reference(x, mask, raw, *, num_heads, temp=1.0, eps=1e-12):
    b, s_len, h = x.shape
    hd = h // num_heads

    def lin(t, w, bias):          # w in PyTorch [out, in] layout
        return t @ w.T + bias

    def ln(y, g, beta):
        u = y.mean(-1, keepdims=True)
        s = ((y - u) ** 2).mean(-1, keepdims=True)
        return g * (y - u) / jnp.sqrt(s + eps) + beta

    def heads(t):
        return t.reshape(b, s_len, num_heads, hd).transpose(0, 2, 1, 3)

    q = heads(lin(x, raw["wq"], raw["bq"]))
    k = heads(lin(x, raw["wk"], raw["bk"]))
    v = heads(lin(x, raw["wv"], raw["bv"]))
    scores = jnp.einsum("bhqd,bhkd->bhqk", q, k) / math.sqrt(hd)
    scores = scores + mask
    probs = jax.nn.softmax(scores / temp, axis=-1)
    ctx = jnp.einsum("bhqk,bhkd->bhqd", probs, v)
    ctx = ctx.transpose(0, 2, 1, 3).reshape(b, s_len, h)
    attn_out = ln(lin(ctx, raw["wo"], raw["bo"]) + x, raw["g1"], raw["be1"])
    inter = lin(attn_out, raw["wi"], raw["bi"])
    inter = inter * 0.5 * (1.0 + jax.scipy.special.erf(inter / math.sqrt(2.0)))
    return ln(lin(inter, raw["w2"], raw["b2"]) + attn_out, raw["g2"], raw["be2"])


if __name__ == "__main__":
    batch, seq, hidden, num_heads, inter_dim = 2, 8, 32, 4, 64
    key = jax.random.PRNGKey(0)
    keys = jax.random.split(key, 8)

    def lin_init(kk, fan_out, fan_in):
        bound = 1.0 / math.sqrt(fan_in)
        kw, kb = jax.random.split(kk)
        w = jax.random.uniform(kw, (fan_out, fan_in), jnp.float32, -bound, bound)
        bias = jax.random.uniform(kb, (fan_out,), jnp.float32, -bound, bound)
        return w, bias

    raw = {}
    raw["wq"], raw["bq"] = lin_init(keys[0], hidden, hidden)
    raw["wk"], raw["bk"] = lin_init(keys[1], hidden, hidden)
    raw["wv"], raw["bv"] = lin_init(keys[2], hidden, hidden)
    raw["wo"], raw["bo"] = lin_init(keys[3], hidden, hidden)
    raw["wi"], raw["bi"] = lin_init(keys[4], inter_dim, hidden)
    raw["w2"], raw["b2"] = lin_init(keys[5], hidden, inter_dim)
    raw["g1"] = jnp.ones((hidden,), jnp.float32)    # BertLayerNorm.weight init
    raw["be1"] = jnp.zeros((hidden,), jnp.float32)  # BertLayerNorm.bias init
    raw["g2"] = jnp.ones((hidden,), jnp.float32)
    raw["be2"] = jnp.zeros((hidden,), jnp.float32)

    x = jax.random.normal(keys[6], (batch, seq, hidden), jnp.float32)
    # additive attention mask [B,1,1,S]: mask the last two key positions of batch 1
    valid = jnp.ones((batch, seq), jnp.float32).at[1, -2:].set(0.0)
    attention_mask = (1.0 - valid)[:, None, None, :] * -10000.0

    params = prepare_params(raw)   # one-time transpose / bf16 cast / packing

    out = bert_layer(x, attention_mask, params, num_heads=num_heads)
    jax.block_until_ready(out)

    ref = bert_layer_reference(x, attention_mask, raw, num_heads=num_heads)
    max_err = jnp.max(jnp.abs(out - ref))
    # bf16 MXU inputs / bf16 inter-kernel activations vs f32 reference.
    assert jnp.allclose(out, ref, atol=5e-2, rtol=5e-2), f"max err {max_err}"
    print("KERNEL_OK")
</pallas_src>

<mosaic_0001>
module attributes {stable_mosaic.version = 11 : i64} {
  func.func @_dense_kernel(%arg0: i32, %arg1: memref<8x32xf32, #tpu.memory_space<vmem>>, %arg2: memref<32x96xbf16, #tpu.memory_space<vmem>>, %arg3: memref<1x96xf32, #tpu.memory_space<vmem>>, %arg4: memref<8x96xbf16, #tpu.memory_space<vmem>>) attributes {dimension_semantics = [#tpu.dimension_semantics<parallel>], iteration_bounds = array<i64: 2>, scalar_prefetch = 0 : i64, scratch_operands = 0 : i64, tpu.core_type = #tpu.core_type<tc>, window_params = [{transform_indices = @transform_0, window_bounds = array<i64: 8, 32>}, {pipeline_mode = #tpu.pipeline_mode<synchronous>, transform_indices = @transform_1, window_bounds = array<i64: 32, 96>}, {pipeline_mode = #tpu.pipeline_mode<synchronous>, transform_indices = @transform_2, window_bounds = array<i64: 1, 96>}, {transform_indices = @transform_3, window_bounds = array<i64: 8, 96>}]} {
    %c0 = arith.constant 0 : index
    %c0_0 = arith.constant 0 : index
    %0 = vector.load %arg1[%c0, %c0_0] : memref<8x32xf32, #tpu.memory_space<vmem>>, vector<8x32xf32>
    %1 = arith.truncf %0 : vector<8x32xf32> to vector<8x32xbf16>
    %c0_1 = arith.constant 0 : index
    %c0_2 = arith.constant 0 : index
    %2 = vector.load %arg2[%c0_1, %c0_2] : memref<32x96xbf16, #tpu.memory_space<vmem>>, vector<32x96xbf16>
    %cst = arith.constant dense<0.000000e+00> : vector<8x96xf32>
    %3 = tpu.matmul %1, %2, %cst {dimension_numbers = #tpu.dot_dimension_numbers<[1], [0], [0], [1], [0, 0, 1, 1], [], []>} : vector<8x32xbf16>, vector<32x96xbf16>, vector<8x96xf32> -> vector<8x96xf32>
    %c0_3 = arith.constant 0 : index
    %c0_4 = arith.constant 0 : index
    %4 = vector.load %arg3[%c0_3, %c0_4] : memref<1x96xf32, #tpu.memory_space<vmem>>, vector<1x96xf32>
    %5 = vector.broadcast %4 : vector<1x96xf32> to vector<8x96xf32>
    %6 = arith.addf %3, %5 : vector<8x96xf32>
    %7 = arith.truncf %6 : vector<8x96xf32> to vector<8x96xbf16>
    %c0_5 = arith.constant 0 : index
    %c0_6 = arith.constant 0 : index
    %8 = vector.load %arg4[%c0_5, %c0_6] : memref<8x96xbf16, #tpu.memory_space<vmem>>, vector<8x96xbf16>
    tpu.vector_store %arg4[%c0_5, %c0_6], %7 {strides = array<i32>} : memref<8x96xbf16, #tpu.memory_space<vmem>>, vector<8x96xbf16>,
    return
  }
  func.func @transform_0(%arg0: i32) -> (i32, i32) {
    %c0_i32 = arith.constant 0 : i32
    %c0_i32_0 = arith.constant 0 : i32
    return %arg0, %c0_i32 : i32, i32
  }
  func.func @transform_1(%arg0: i32) -> (i32, i32) {
    %c0_i32 = arith.constant 0 : i32
    %c0_i32_0 = arith.constant 0 : i32
    %c0_i32_1 = arith.constant 0 : i32
    return %c0_i32, %c0_i32_0 : i32, i32
  }
  func.func @transform_2(%arg0: i32) -> (i32, i32) {
    %c0_i32 = arith.constant 0 : i32
    %c0_i32_0 = arith.constant 0 : i32
    %c0_i32_1 = arith.constant 0 : i32
    return %c0_i32, %c0_i32_0 : i32, i32
  }
  func.func @transform_3(%arg0: i32) -> (i32, i32) {
    %c0_i32 = arith.constant 0 : i32
    %c0_i32_0 = arith.constant 0 : i32
    return %arg0, %c0_i32 : i32, i32
  }
}

</mosaic_0001>

<llo_original>
// kernel: tpu_custom_call.1
$region0: #{tpu_custom_call.1}
  #allocation0 [shape = 'u32[]', space=smem, size = 0x4, offset = 0x4, fixed_abs, tag = 'smem constant byte address 0x4 - core index']
  #allocation1 [shape = 'u32[144,128]{1,0:T(1,128)}', space=vmem, size = 0x12000, scoped, tag = 'internal scratch']
  %s0 = inlined_call_operand.hbm [shape: f32[16,32], index: 0, kind: input, shape index: {}]
  %s1 = inlined_call_operand.hbm [shape: bf16[32,96], index: 1, kind: input, shape index: {}]
  %s2 = inlined_call_operand.vmem [shape: f32[1,96], index: 2, kind: input, shape index: {}]
  %s3 = inlined_call_operand.hbm [shape: bf16[16,96], index: 3, kind: output, shape index: {}]
  %s4 = sld [smem:[#allocation0]]
  $region53: #{tpu_custom_call.1} parent=0
    _
  %s6 = ssub.s32 1, %s4
  %s7 = scalar_select 0, %s6, %s4
  $region1: #{tpu_custom_call.1} parent=0
    #allocation2 [shape = 'u8[8192]{0}', space=vmem, size = 0x2000, scoped, tag = 'input window, operand 0']
    #allocation3 [shape = 's32[2]{0}', space=sflag, size = 0x8, scoped, tag = 'scoped memory for tpu_custom_call.1']
    #allocation4 [shape = 's32[2]{0}', space=sflag, size = 0x8, scoped, tag = 'scoped memory for tpu_custom_call.1']
    #allocation5 [shape = 'u8[8192]{0}', space=vmem, size = 0x2000, scoped, tag = 'input window, operand 1, single buffered']
    #allocation6 [shape = 's32[1]{0}', space=sflag, size = 0x4, scoped, tag = 'scoped memory for tpu_custom_call.1']
    #allocation7 [shape = 'u8[4096]{0}', space=vmem, size = 0x1000, scoped, tag = 'output window, operand 0']
    %8 = vsyncpa [#allocation3], 0
    %s9 = scalar_lea.sflag [#allocation3], 1
    %10 = vsyncpa %s9, 0
    %11 = vsyncpa [#allocation6], 0
    %12 = vsyncpa [#allocation4], 0
    %s13 = scalar_lea.sflag [#allocation4], 1
    %14 = vsyncpa %s13, 0
    loop: start=0, step=1, limit=4
    $region2: #{tpu_custom_call.1} parent=1 // loop_pre_header
      _
    $region3: #{tpu_custom_call.1} parent=1 // loop_header
      %s16 = sphi 0, %s20
      %p17 = scmp.ge.s32.totalorder %s16, 4
      %s26 = sphi 0, %s28
      %s29 = sphi 0, %s26
      %s30 = sphi 0, %s29
      %s46 = sphi 0, %s30
      %s50 = sphi 0, %s50
      %s52 = sphi 0, %s50
      %s53 = sphi 0, %s52
      %s67 = sphi 0, %s53
      %s71 = sphi 0, %s71
      %s73 = sphi 0, %s71
      %s74 = sphi 0, %s73
      %s88 = sphi 0, %s74
      %s94 = sphi 0, %s96
      %s97 = sphi 0, %s94
      %s98 = sphi 0, %s97
      %s114 = sphi 0, %s98
    $region4: #{tpu_custom_call.1} parent=1 // loop_header_branch
      %19 = sbr.rel (%p17) target = $region8
    $region5: #{tpu_custom_call.1} parent=1 // loop_body
      %s21 = ssub.s32 %s16, 1
      %s22 = ssub.s32 %s16, 2
      %s23 = sadd.s32 %s16, 1
      %s24 = ssub.s32 %s16, %s23
      %p25 = scmp.eq.s32.totalorder %s24, 0
      %s27 = sadd.s32 %s26, 1
      %s28 = scalar_select %p25, %s26, %s27
      %p31 = pneg %p25
      %p32 = scmp.eq.s32.totalorder %s16, 1
      %p33 = por %p31, %p32
      %p34 = scmp.ne.s32.totalorder %s26, %s29
      %p35 = scmp.eq.s32.totalorder %s16, 0
      %p36 = por %p34, %p35
      %p37 = scmp.ne.s32.totalorder %s26, %s29
      %p38 = scmp.eq.s32.totalorder %s21, 1
      %p39 = por %p37, %p38
      %p40 = scmp.ne.s32.totalorder %s29, %s30
      %p41 = scmp.eq.s32.totalorder %s21, 0
      %p42 = por %p40, %p41
      %p43 = scmp.ne.s32.totalorder %s29, %s30
      %p44 = scmp.eq.s32.totalorder %s22, 1
      %p45 = por %p43, %p44
      %p47 = scmp.ne.s32.totalorder %s30, %s46
      %p48 = scmp.eq.s32.totalorder %s22, 0
      %p49 = por %p47, %p48
      %s51 = sadd.s32 %s50, 1
      %p54 = scmp.eq.s32.totalorder %s16, 1
      %p55 = scmp.ne.s32.totalorder %s50, %s52
      %p56 = scmp.eq.s32.totalorder %s16, 0
      %p57 = por %p55, %p56
      %p58 = scmp.ne.s32.totalorder %s50, %s52
      %p59 = scmp.eq.s32.totalorder %s21, 1
      %p60 = por %p58, %p59
      %p61 = scmp.ne.s32.totalorder %s52, %s53
      %p62 = scmp.eq.s32.totalorder %s21, 0
      %p63 = por %p61, %p62
      %p64 = scmp.ne.s32.totalorder %s52, %s53
      %p65 = scmp.eq.s32.totalorder %s22, 1
      %p66 = por %p64, %p65
      %p68 = scmp.ne.s32.totalorder %s53, %s67
      %p69 = scmp.eq.s32.totalorder %s22, 0
      %p70 = por %p68, %p69
      %s72 = sadd.s32 %s71, 1
      %p75 = scmp.eq.s32.totalorder %s16, 1
      %p76 = scmp.ne.s32.totalorder %s71, %s73
      %p77 = scmp.eq.s32.totalorder %s16, 0
      %p78 = por %p76, %p77
      %p79 = scmp.ne.s32.totalorder %s71, %s73
      %p80 = scmp.eq.s32.totalorder %s21, 1
      %p81 = por %p79, %p80
      %p82 = scmp.ne.s32.totalorder %s73, %s74
      %p83 = scmp.eq.s32.totalorder %s21, 0
      %p84 = por %p82, %p83
      %p85 = scmp.ne.s32.totalorder %s73, %s74
      %p86 = scmp.eq.s32.totalorder %s22, 1
      %p87 = por %p85, %p86
      %p89 = scmp.ne.s32.totalorder %s74, %s88
      %p90 = scmp.eq.s32.totalorder %s22, 0
      %p91 = por %p89, %p90
      %s92 = ssub.s32 %s16, %s23
      %p93 = scmp.eq.s32.totalorder %s92, 0
      %s95 = sadd.s32 %s94, 1
      %s96 = scalar_select %p93, %s94, %s95
      %p99 = pneg %p93
      %p100 = scmp.eq.s32.totalorder %s16, 1
      %p101 = por %p99, %p100
      %p102 = scmp.ne.s32.totalorder %s94, %s97
      %p103 = scmp.eq.s32.totalorder %s16, 0
      %p104 = por %p102, %p103
      %p105 = scmp.ne.s32.totalorder %s94, %s97
      %p106 = scmp.eq.s32.totalorder %s21, 1
      %p107 = por %p105, %p106
      %p108 = scmp.ne.s32.totalorder %s97, %s98
      %p109 = scmp.eq.s32.totalorder %s21, 0
      %p110 = por %p108, %p109
      %p111 = scmp.ne.s32.totalorder %s97, %s98
      %p112 = scmp.eq.s32.totalorder %s22, 1
      %p113 = por %p111, %p112
      %p115 = scmp.ne.s32.totalorder %s98, %s114
      %p116 = scmp.eq.s32.totalorder %s22, 0
      %p117 = por %p115, %p116
      %p118 = scmp.le.s32.totalorder 1, %s16
      %p119 = scmp.lt.s32.totalorder %s16, 3
      %p120 = pnand %p118, %p119
      %p121 = pneg %p120
      // Predicated region
      $region9: #{tpu_custom_call.1} parent=5 // pred_check
        _
      $region10: #{tpu_custom_call.1} parent=5 // pred_check_branch
        %123 = sbr.rel (%p120) target = $region12
      $region11: #{tpu_custom_call.1} parent=5 // pred_region
        %s124 = ssub.s32 %s16, 1
        // Predicated region
        $region13: #{tpu_custom_call.1} parent=11 // pred_check
          %p125 = pneg %p63
        $region14: #{tpu_custom_call.1} parent=11 // pred_check_branch
          %127 = sbr.rel (%p125) target = $region16
        $region15: #{tpu_custom_call.1} parent=11 // pred_region
          %s129 = ssub.s32 256, 256
          %130 = vsyncadd [#allocation6], %s129
          %s131 = sshll.u32 [#allocation5], 4
          %s132 = int_to_ptr.vmem [resolvable:$true] %s131
          %137 = dma.hbm_to_vmem [thread:$0]  %s1, 256, %s132, [#allocation6], 64, 64, 4
        $region16: #{tpu_custom_call.1} parent=11 // pred_fallthru
          _
        // Predicated region
        $region17: #{tpu_custom_call.1} parent=11 // pred_check
          %p138 = pneg %p84
        $region18: #{tpu_custom_call.1} parent=11 // pred_check_branch
          %140 = sbr.rel (%p138) target = $region20
        $region19: #{tpu_custom_call.1} parent=11 // pred_region
          _
        $region20: #{tpu_custom_call.1} parent=11 // pred_fallthru
          _
      $region12: #{tpu_custom_call.1} parent=5 // pred_fallthru
        _
      %p141 = scmp.lt.s32.totalorder %s16, 2
      // Predicated region
      $region21: #{tpu_custom_call.1} parent=5 // pred_check
        %p142 = pneg %p141
      $region22: #{tpu_custom_call.1} parent=5 // pred_check_branch
        %144 = sbr.rel (%p142) target = $region24
      $region23: #{tpu_custom_call.1} parent=5 // pred_region
        // Predicated region
        $region25: #{tpu_custom_call.1} parent=23 // pred_check
          %p145 = pneg %p36
        $region26: #{tpu_custom_call.1} parent=23 // pred_check_branch
          %147 = sbr.rel (%p145) target = $region28
        $region27: #{tpu_custom_call.1} parent=23 // pred_region
          %s148 = sand.u32 %s26, 1
          %s149 = scalar_lea.sflag [#allocation3], %s148
          %s150 = sand.u32 %s26, 1
          %s151 = smul.addr %s150, 8
          %s152 = scalar_lea.vmem [#allocation2], %s151
          %s154 = ssub.s32 128, 128
          %155 = vsyncadd %s149, %s154
          %s156 = smul.addr %s16, 128
          %s157 = scalar_lea.hbm %s0, %s156
          %s159 = sshll.u32 %s152, 4
          %s160 = int_to_ptr.vmem [resolvable:$true] %s159
          %162 = dma.hbm_to_vmem [thread:$0]  %s157, 128, %s160, %s149
        $region28: #{tpu_custom_call.1} parent=23 // pred_fallthru
          _
      $region24: #{tpu_custom_call.1} parent=5 // pred_fallthru
        _
      %p163 = scmp.le.s32.totalorder 1, %s16
      %p164 = scmp.lt.s32.totalorder %s16, 3
      %p165 = pnand %p163, %p164
      %p166 = pneg %p165
      // Predicated region
      $region29: #{tpu_custom_call.1} parent=5 // pred_check
        _
      $region30: #{tpu_custom_call.1} parent=5 // pred_check_branch
        %168 = sbr.rel (%p165) target = $region32
      $region31: #{tpu_custom_call.1} parent=5 // pred_region
        %s169 = ssub.s32 %s16, 1
        %s170 = sand.u32 %s29, 1
        %s171 = scalar_lea.sflag [#allocation3], %s170
        %s172 = sand.u32 %s29, 1
        %s173 = smul.addr %s172, 8
        %s174 = scalar_lea.vmem [#allocation2], %s173
        // Predicated region
        $region33: #{tpu_custom_call.1} parent=31 // pred_check
          %p175 = pneg %p42
        $region34: #{tpu_custom_call.1} parent=31 // pred_check_branch
          %177 = sbr.rel (%p175) target = $region36
        $region35: #{tpu_custom_call.1} parent=31 // pred_region
          %178 = dma.done %s171, 128
        $region36: #{tpu_custom_call.1} parent=31 // pred_fallthru
          _
        // Predicated region
        $region37: #{tpu_custom_call.1} parent=31 // pred_check
          %p179 = pneg %p63
        $region38: #{tpu_custom_call.1} parent=31 // pred_check_branch
          %181 = sbr.rel (%p179) target = $region40
        $region39: #{tpu_custom_call.1} parent=31 // pred_region
          %182 = dma.done [#allocation6], 256
        $region40: #{tpu_custom_call.1} parent=31 // pred_fallthru
          _
        %s183 = sand.u32 %s29, 1
        %s184 = scalar_lea.sflag [#allocation3], %s183
        %s185 = sand.u32 %s29, 1
        %s186 = smul.addr %s185, 8
        %s187 = scalar_lea.vmem [#allocation2], %s186
        %p188 = pneg %p42
        %p189 = pneg %p39
        %p190 = pneg %p63
        %p191 = pneg %p60
        %p192 = pneg %p84
        %p193 = pneg %p81
        %p194 = pneg %p110
        %p195 = pneg %p107
        %s196 = sand.u32 %s97, 1
        %s197 = scalar_lea.sflag [#allocation4], %s196
        %s198 = sand.u32 %s97, 1
        %s199 = smul.addr %s198, 4
        %s200 = scalar_lea.vmem [#allocation7], %s199
        %v202 = vld [vmem:[%s174] sm:$0xff]
        %v203 = vpack.c.bf16 %v202, %v202
        %v204 = vld [vmem:[#allocation5] sm:$0xf]
        %v205 = vld [vmem:[#allocation5 + $0x4] sm:$0xf]
        %v206 = vld [vmem:[#allocation5 + $0x8] sm:$0xf]
        %v207 = vld [vmem:[#allocation5 + $0xc] sm:$0xf]
        %v208 = vld [vmem:[%s2] sm:$0x1]
        %v210 = vlaneseq
        %v211 = vshrl.u32 %v210, 7
        %v212 = vsub.s32 0, %v211
        %v213 = vrot.slane %v208, %v212
        %v219 = vunpack.c.l.b16 %v204
        %v220 = vunpack.c.l.b16 %v205
        %v221 = vunpack.c.l.b16 %v206
        %v222 = vunpack.c.l.b16 %v207
        %v223 = vpack.c.b16 %v220, %v219
        %v224 = vpack.c.b16 %v222, %v221
        %vm227 = vcmask 261120
        %v229 = vsel %vm227, %v203, 0
        %231 = vmatprep.subr.bf16.mxu0 0
        %232 = vmatpush1.bf16.msra.mxu0 0
        %233 = vmatprep.subr.bf16.mxu0 0
        %234 = vmatpush1.bf16.msra.mxu0 0
        %235 = vmatprep.subr.bf16.mxu0 0
        %236 = vmatpush1.bf16.msra.mxu0 0
        %237 = vmatprep.subr.bf16.mxu0 0
        %238 = vmatpush1.bf16.msra.mxu0 0
        %239 = vmatprep.subr.bf16.mxu0 0
        %240 = vmatpush1.bf16.msra.mxu0 0
        %241 = vmatprep.subr.bf16.mxu0 0
        %242 = vmatpush1.bf16.msra.mxu0 0
        %243 = vmatprep.subr.bf16.mxu0 0
        %244 = vmatpush1.bf16.msra.mxu0 %v224
        %245 = vmatprep.subr.bf16.mxu0 0
        %246 = vmatpush1.bf16.msra.mxu0 %v223
        %247 = vmatprep.subr.bf16.mxu0 0
        %248 = vmatpush2.bf16.msra.mxu0 0
        %249 = vmatprep.subr.bf16.mxu0 0
        %250 = vmatpush2.bf16.msra.mxu0 0
        %251 = vmatprep.subr.bf16.mxu0 0
        %252 = vmatpush2.bf16.msra.mxu0 0
        %253 = vmatprep.subr.bf16.mxu0 0
        %254 = vmatpush2.bf16.msra.mxu0 0
        %255 = vmatprep.subr.bf16.mxu0 0
        %256 = vmatpush2.bf16.msra.mxu0 0
        %257 = vmatprep.subr.bf16.mxu0 0
        %258 = vmatpush2.bf16.msra.mxu0 0
        %259 = vmatprep.subr.bf16.mxu0 0
        %260 = vmatpush2.bf16.msra.mxu0 0
        %261 = vmatprep.subr.bf16.mxu0 0
        %262 = vmatpush2.bf16.msra.mxu0 0
        %263 = vmatprep.mubr.bf16.mxu0 0
        %264 = vmatmul.mubr.bf16.gmra.mxu0 %v229
        %v265 = vpop.f32.mrf.mxu0
        %v266 = vadd.f32 %v213, %v265
        %v267 = vpop.f32.mrf.mxu0
        %v268 = vpop.f32.mrf.mxu0
        %v269 = vpop.f32.mrf.mxu0
        %270 = vdwg.mxu0
        %v271 = vpack.c.bf16 %v266, %v266
        %vm272 = vcmask 781312
        %273 = vst.msk [vmem:[%s200] sm:$0xf] %vm272, %v271
        %s274 = sand.u32 %s97, 1
        %s275 = scalar_lea.sflag [#allocation4], %s274
        %s276 = sand.u32 %s97, 1
        %s277 = smul.addr %s276, 4
        %s278 = scalar_lea.vmem [#allocation7], %s277
        // Predicated region
        $region41: #{tpu_custom_call.1} parent=31 // pred_check
          %p279 = pneg %p107
        $region42: #{tpu_custom_call.1} parent=31 // pred_check_branch
          %281 = sbr.rel (%p279) target = $region44
        $region43: #{tpu_custom_call.1} parent=31 // pred_region
          %s283 = ssub.s32 64, 64
          %284 = vsyncadd %s275, %s283
          %s285 = smul.addr %s21, 64
          %s286 = scalar_lea.hbm %s3, %s285
          %s288 = sshll.u32 %s278, 4
          %s289 = int_to_ptr.vmem [resolvable:$true] %s288
          %291 = dma.vmem_to_hbm [thread:$0]  %s289, 64, %s286, %s275
        $region44: #{tpu_custom_call.1} parent=31 // pred_fallthru
          _
      $region32: #{tpu_custom_call.1} parent=5 // pred_fallthru
        _
      %p292 = scmp.le.s32.totalorder 2, %s16
      // Predicated region
      $region45: #{tpu_custom_call.1} parent=5 // pred_check
        %p293 = pneg %p292
      $region46: #{tpu_custom_call.1} parent=5 // pred_check_branch
        %295 = sbr.rel (%p293) target = $region48
      $region47: #{tpu_custom_call.1} parent=5 // pred_region
        %s296 = ssub.s32 %s16, 2
        // Predicated region
        $region49: #{tpu_custom_call.1} parent=47 // pred_check
          %p297 = pneg %p113
        $region50: #{tpu_custom_call.1} parent=47 // pred_check_branch
          %299 = sbr.rel (%p297) target = $region52
        $region51: #{tpu_custom_call.1} parent=47 // pred_region
          %s300 = sand.u32 %s98, 1
          %s301 = scalar_lea.sflag [#allocation4], %s300
          %s302 = sand.u32 %s98, 1
          %s303 = smul.addr %s302, 4
          %s304 = scalar_lea.vmem [#allocation7], %s303
          %305 = dma.done %s301, 64
        $region52: #{tpu_custom_call.1} parent=47 // pred_fallthru
          _
      $region48: #{tpu_custom_call.1} parent=5 // pred_fallthru
        _
    $region6: #{tpu_custom_call.1} parent=1 // loop_footer
      %s20 = sadd.s32 1, %s16
    $region7: #{tpu_custom_call.1} parent=1 // loop_footer_branch
      %15 = sbr.rel target = $region3
    $region8: #{tpu_custom_call.1} parent=1 // loop_exit
      _
    %306 = vsyncpa [#allocation3], 1
    %s307 = scalar_lea.sflag [#allocation3], 1
    %308 = vsyncpa %s307, 1
    %309 = vsyncpa [#allocation6], 1
    %310 = vsyncpa [#allocation4], 1
    %s311 = scalar_lea.sflag [#allocation4], 1
    %312 = vsyncpa %s311, 1

</llo_original>
